<compile_context>
chip_gen: v7x
topology: tpu7x:2x2x1
jax: 0.10.0
libtpu: 0.0.40
codegen_flags: <defaults>
</compile_context>

<pallas_src>
import functools

import jax
import jax.numpy as jnp
from jax.experimental import pallas as pl
from jax.experimental.pallas import tpu as pltpu

EPS = 1e-8  # safe_norm epsilon


def _gcp3_kernel(x_ref, w_vd_ref, w_sum_ref, w_so_ref, b_so_ref,
                 w_up_ref, w_vg_ref, b_vg_ref, out_ref,
                 *, si, vi, hid, so, vo, blockdiag):
    f32 = jnp.float32
    x = x_ref[...].astype(f32)                      # (tile, si + 3*vi + 9)
    s = x[:, :si]                                   # (tile, si)
    vflat = x[:, si:si + 3 * vi]                    # coord-major lanes [c*vi + i]
    fflat = x[:, si + 3 * vi:si + 3 * vi + 9]       # frames row-major [3*a + s]

    if blockdiag:
        # one block-diagonal dot producing [vhr (3*hid) | v27 (27, wdf replicated x3)]
        vcat = jnp.dot(vflat, w_vd_ref[...], preferred_element_type=f32)
        vhr = vcat[:, :3 * hid]
        v27 = vcat[:, 3 * hid:3 * hid + 27]         # v27[:, 9c+3a+s] = vdf[n, c, s]
        # coordinate sum of squares on the MXU (avoids misaligned lane-offset adds)
        sumsq = jnp.dot(vhr * vhr, w_sum_ref[...], preferred_element_type=f32)
        vup = jnp.dot(vhr, w_up_ref[...], preferred_element_type=f32)   # (tile, 3*vo)
    else:
        # per-coordinate dots reusing the shared (vi, hid+9) / (hid, vo) weights
        v27_parts, vup_parts, sumsq = [], [], None
        for c in range(3):
            vc = vflat[:, c * vi:(c + 1) * vi]
            r = jnp.dot(vc, w_vd_ref[...], preferred_element_type=f32)  # (tile, hid+9)
            vhr_c = r[:, :hid]
            v27_parts.append(r[:, hid:hid + 9])
            vup_parts.append(jnp.dot(vhr_c, w_up_ref[...], preferred_element_type=f32))
            sq = vhr_c * vhr_c
            sumsq = sq if sumsq is None else sumsq + sq
        v27 = jnp.concatenate(v27_parts, axis=-1)
        vup = jnp.concatenate(vup_parts, axis=-1)

    # safe_norm stays in f32 (EPS underflows bf16)
    vnorm = jnp.sqrt(sumsq + EPS) + EPS             # (tile, hid)

    # frame scalarization: ONE wide VPU multiply feeding the fused scalar dot
    f27 = jnp.concatenate([fflat, fflat, fflat], axis=-1)       # f27[:, 9c+3a+s] = F[n,a,s]
    prod27 = f27 * v27                                          # (tile, 27)

    # scalar_out: single fused dot of [s | vnorm | prod27] + bias, then SiLU
    so_operand = jnp.concatenate([s, vnorm, prod27], axis=-1)   # (tile, si+hid+27)
    so_lin = (jnp.dot(so_operand, w_so_ref[...], preferred_element_type=f32)
              + b_so_ref[...])
    silu_so = so_lin * jax.nn.sigmoid(so_lin)                   # (tile, so)

    # vector gate: sigmoid(Linear(SiLU(scalar_rep))), replicated over 3 coords
    gate = jax.nn.sigmoid(
        jnp.dot(silu_so, w_vg_ref[...], preferred_element_type=f32) + b_vg_ref[...])
    gated = vup * jnp.concatenate([gate, gate, gate], axis=-1)  # (tile, 3*vo)

    # single packed, lane-dense output block: [scalar_out | vec_x | vec_y | vec_z]
    out_ref[...] = jnp.concatenate([silu_so, gated], axis=-1).astype(out_ref.dtype)


def _round_up(x, m):
    return (x + m - 1) // m * m


def gcp3_forward(scalar_rep, vector_rep, edge_index, frames, params,
                 tile_n=4096, io_dtype=jnp.float32, force_per_coordinate=False):
    """GCP3 forward (default hyperparameters, node_inputs=False).

    scalar_rep: (N, si) f32
    vector_rep: (N, vi, 3) f32   (PyTorch layout, xyz last)
    edge_index: (2, N) int32     (unused for node_inputs=False, node_mask=None)
    frames:     (N, 3, 3) f32
    returns (scalar_out (N, so), vector_out (N, vo, 3)) in io_dtype
    """
    del edge_index  # only used by scalarize/vectorize when node_inputs=True
    N, si = scalar_rep.shape
    _, vi, _ = vector_rep.shape
    hid = params["wd"].shape[1]
    so = params["wso"].shape[1]
    vo = params["wup"].shape[1]

    f32 = jnp.float32
    wd = params["wd"].astype(f32)
    wdf = params["wdf"].astype(f32)
    wso = params["wso"].astype(f32)
    wup = params["wup"].astype(f32)
    wvg = params["wvg"].astype(f32)
    bso = params["bso"].astype(f32)
    bvg = params["bvg"].astype(f32)

    # block-diagonal fusion only while the fused K / N dims fit one MXU tile
    blockdiag = (not force_per_coordinate) and (3 * vi <= 128) and (3 * hid <= 128)

    # wdf columns replicated 3x per coordinate: cols [3a+s] = wdf[:, s]
    wdf27 = jnp.tile(wdf, (1, 3))                               # (vi, 9)
    if blockdiag:
        w_vd = jnp.zeros((3 * vi, 3 * hid + 27), f32)
        w_up = jnp.zeros((3 * hid, 3 * vo), f32)
        for c in range(3):
            w_vd = w_vd.at[c * vi:(c + 1) * vi, c * hid:(c + 1) * hid].set(wd)
            w_vd = w_vd.at[c * vi:(c + 1) * vi,
                           3 * hid + 9 * c:3 * hid + 9 * (c + 1)].set(wdf27)
            w_up = w_up.at[c * hid:(c + 1) * hid, c * vo:(c + 1) * vo].set(wup)
    else:
        w_vd = jnp.concatenate([wd, wdf27], axis=1)             # (vi, hid + 9)
        w_up = wup                                              # (hid, vo)
    w_sum = jnp.tile(jnp.eye(hid, dtype=f32), (3, 1))           # (3*hid, hid) 0/1 coord-sum

    # fused scalar_out weight: [scalar rows ; vnorm rows ; 9 frame rows repeated 3x]
    w_so = jnp.concatenate(
        [wso[:si], wso[si:si + hid],
         jnp.repeat(wso[si + hid:si + hid + 9], 3, axis=0)], axis=0)   # (si+hid+27, so)

    # single merged, lane-flat input block: [scalar | vec(coord-major) | frames]
    v_flat = jnp.swapaxes(vector_rep, -1, -2).reshape(N, 3 * vi)
    f_flat = frames.reshape(N, 9)
    x = jnp.concatenate([scalar_rep, v_flat, f_flat], axis=-1).astype(io_dtype)

    in_width = si + 3 * vi + 9
    out_width = so + 3 * vo

    # row tiling: big tiles to amortize the fixed per-step pipeline cost, capped
    # against scoped VMEM; keep >= 2 grid steps for large N (v7x dual TC).
    row_bytes = 4 * 10 * max(in_width, out_width, si + hid + 27, 3 * hid + 27)
    vmem_budget = 20 * 1024 * 1024
    tile = max(16, min(int(tile_n), vmem_budget // row_bytes))
    if N > 2048:
        tile = min(tile, _round_up((N + 1) // 2, 16))
    tile = _round_up(min(tile, _round_up(N, 16)), 16)
    n_pad = _round_up(N, tile)
    if n_pad != N:
        x = jnp.pad(x, ((0, n_pad - N), (0, 0)))
    grid = (n_pad // tile,)

    weights = (w_vd, w_sum, w_so, bso, w_up, wvg, bvg)
    in_specs = ([pl.BlockSpec((tile, in_width), lambda i: (i, 0))]
                + [pl.BlockSpec(w.shape, lambda i: (0, 0)) for w in weights])
    out_spec = pl.BlockSpec((tile, out_width), lambda i: (i, 0))
    out_shape = jax.ShapeDtypeStruct((n_pad, out_width), io_dtype)

    # cost estimate: flops the kernel actually issues (block-diag K included)
    if blockdiag:
        mm_flops = 3 * vi * (3 * hid + 27) + 3 * hid * hid + 3 * hid * 3 * vo
    else:
        mm_flops = 3 * (vi * (hid + 9) + hid * vo)
    mm_flops += (si + hid + 27) * so + so * vo
    io_item = jnp.dtype(io_dtype).itemsize
    cost = pl.CostEstimate(
        flops=2 * n_pad * mm_flops,
        transcendentals=n_pad * (hid + so + vo),   # sqrt + SiLU sigmoid + gate sigmoid
        bytes_accessed=(n_pad * (in_width + out_width) * io_item
                        + 4 * sum(int(w.size) for w in weights)))

    kernel = functools.partial(_gcp3_kernel, si=si, vi=vi, hid=hid, so=so, vo=vo,
                               blockdiag=blockdiag)
    packed = pl.pallas_call(
        kernel,
        grid=grid,
        in_specs=in_specs,
        out_specs=out_spec,
        out_shape=out_shape,
        compiler_params=pltpu.CompilerParams(
            dimension_semantics=("parallel",),
            vmem_limit_bytes=32 * 1024 * 1024,
        ),
        cost_estimate=cost,
    )(x, *weights)

    packed = packed[:N]
    s_out = packed[:, :so]
    v_out = jnp.swapaxes(packed[:, so:].reshape(N, 3, vo), -1, -2)  # (N, vo, 3)
    return s_out, v_out


def gcp3_reference(scalar_rep, vector_rep, frames, params):
    """Pure-JAX reference mirroring the PyTorch forward (default config)."""
    v_pre = jnp.swapaxes(vector_rep, -1, -2)                         # (N, 3, vi)
    vhr = jnp.einsum("nci,ih->nch", v_pre, params["wd"])             # (N, 3, hid)
    vnorm = jnp.sqrt(jnp.sum(vhr ** 2, axis=-2) + EPS) + EPS         # (N, hid)
    vdf = jnp.einsum("nci,ik->nck", v_pre, params["wdf"])            # (N, 3, 3)
    vdf_t = jnp.swapaxes(vdf, -1, -2)
    local = jnp.einsum("nas,nsc->nac", frames, vdf_t)                # (N, 3, 3)
    scalar_hidden = jnp.swapaxes(local, -1, -2).reshape(vector_rep.shape[0], 9)
    merged = jnp.concatenate([scalar_rep, vnorm, scalar_hidden], axis=-1)
    so_lin = merged @ params["wso"] + params["bso"][0]
    silu_so = jax.nn.silu(so_lin)
    vup = jnp.einsum("nch,ho->nco", vhr, params["wup"])              # (N, 3, vo)
    vrep = jnp.swapaxes(vup, -1, -2)                                 # (N, vo, 3)
    gate = silu_so @ params["wvg"] + params["bvg"][0]
    return silu_so, vrep * jax.nn.sigmoid(gate)[:, :, None]


def init_params(key, si, vi, so, vo):
    hid = max(vi, vo)                 # bottleneck=1
    merged_dim = si + hid + 9         # scalarization_vectorization_output_dim * 3 = 9
    ks = jax.random.split(key, 7)
    scale = 0.1
    return {
        "wd": scale * jax.random.normal(ks[0], (vi, hid), jnp.float32),
        "wdf": scale * jax.random.normal(ks[1], (vi, 3), jnp.float32),
        "wso": scale * jax.random.normal(ks[2], (merged_dim, so), jnp.float32),
        "bso": scale * jax.random.normal(ks[3], (1, so), jnp.float32),
        "wup": scale * jax.random.normal(ks[4], (hid, vo), jnp.float32),
        "wvg": scale * jax.random.normal(ks[5], (so, vo), jnp.float32),
        "bvg": scale * jax.random.normal(ks[6], (1, vo), jnp.float32),
    }


if __name__ == "__main__":
    key = jax.random.PRNGKey(0)
    k_s, k_v, k_f, k_p = jax.random.split(key, 4)

    # N deliberately not a multiple of 16 to exercise the padding path.
    N, si, vi, so, vo = 20, 16, 4, 16, 4   # entities = edges (node_inputs=False)

    scalar_rep = jax.random.normal(k_s, (N, si), jnp.float32)
    vector_rep = jax.random.normal(k_v, (N, vi, 3), jnp.float32)
    frames = jax.random.normal(k_f, (N, 3, 3), jnp.float32)
    # edge_index is only consumed by scalarize/vectorize when node_inputs=True
    edge_index = jnp.stack([jnp.arange(N, dtype=jnp.int32),
                            (jnp.arange(N, dtype=jnp.int32) + 1) % N])

    params = init_params(k_p, si, vi, so, vo)

    s_ref, v_ref = gcp3_reference(scalar_rep, vector_rep, frames, params)

    # default config: f32 I/O, big tile (single grid step at this toy N)
    s_out, v_out = gcp3_forward(scalar_rep, vector_rep, edge_index, frames, params)
    jax.block_until_ready((s_out, v_out))
    assert s_out.shape == (N, so) and v_out.shape == (N, vo, 3)
    assert jnp.allclose(s_out, s_ref, atol=1e-4, rtol=1e-4)
    assert jnp.allclose(v_out, v_ref, atol=1e-4, rtol=1e-4)

    # small-tile config to exercise a multi-step grid + resident weights
    s2, v2 = gcp3_forward(scalar_rep, vector_rep, edge_index, frames, params, tile_n=16)
    jax.block_until_ready((s2, v2))
    assert jnp.allclose(s2, s_ref, atol=1e-4, rtol=1e-4)
    assert jnp.allclose(v2, v_ref, atol=1e-4, rtol=1e-4)

    # per-coordinate (non-block-diagonal) path, used when 3*vi / 3*hid > 128
    s3, v3 = gcp3_forward(scalar_rep, vector_rep, edge_index, frames, params,
                          force_per_coordinate=True)
    jax.block_until_ready((s3, v3))
    assert jnp.allclose(s3, s_ref, atol=1e-4, rtol=1e-4)
    assert jnp.allclose(v3, v_ref, atol=1e-4, rtol=1e-4)

    # bf16 HBM I/O (f32 accumulation and f32 safe_norm inside the kernel)
    s4, v4 = gcp3_forward(scalar_rep, vector_rep, edge_index, frames, params,
                          io_dtype=jnp.bfloat16)
    jax.block_until_ready((s4, v4))
    assert jnp.allclose(s4.astype(jnp.float32), s_ref, atol=5e-2, rtol=5e-2)
    assert jnp.allclose(v4.astype(jnp.float32), v_ref, atol=5e-2, rtol=5e-2)

    print("KERNEL_OK")
</pallas_src>

<mosaic_0001>
module attributes {stable_mosaic.version = 11 : i64} {
  func.func @_gcp3_kernel(%arg0: i32, %arg1: memref<32x37xf32, #tpu.memory_space<vmem>>, %arg2: memref<12x39xf32, #tpu.memory_space<vmem>>, %arg3: memref<12x4xf32, #tpu.memory_space<vmem>>, %arg4: memref<47x16xf32, #tpu.memory_space<vmem>>, %arg5: memref<1x16xf32, #tpu.memory_space<vmem>>, %arg6: memref<12x12xf32, #tpu.memory_space<vmem>>, %arg7: memref<16x4xf32, #tpu.memory_space<vmem>>, %arg8: memref<1x4xf32, #tpu.memory_space<vmem>>, %arg9: memref<32x28xf32, #tpu.memory_space<vmem>>) attributes {dimension_semantics = [#tpu.dimension_semantics<parallel>], iteration_bounds = array<i64: 1>, scalar_prefetch = 0 : i64, scratch_operands = 0 : i64, tpu.core_type = #tpu.core_type<tc>, window_params = [{transform_indices = @transform_0, window_bounds = array<i64: 32, 37>}, {pipeline_mode = #tpu.pipeline_mode<synchronous>, transform_indices = @transform_1, window_bounds = array<i64: 12, 39>}, {pipeline_mode = #tpu.pipeline_mode<synchronous>, transform_indices = @transform_2, window_bounds = array<i64: 12, 4>}, {pipeline_mode = #tpu.pipeline_mode<synchronous>, transform_indices = @transform_3, window_bounds = array<i64: 47, 16>}, {pipeline_mode = #tpu.pipeline_mode<synchronous>, transform_indices = @transform_4, window_bounds = array<i64: 1, 16>}, {pipeline_mode = #tpu.pipeline_mode<synchronous>, transform_indices = @transform_5, window_bounds = array<i64: 12, 12>}, {pipeline_mode = #tpu.pipeline_mode<synchronous>, transform_indices = @transform_6, window_bounds = array<i64: 16, 4>}, {pipeline_mode = #tpu.pipeline_mode<synchronous>, transform_indices = @transform_7, window_bounds = array<i64: 1, 4>}, {transform_indices = @transform_8, window_bounds = array<i64: 32, 28>}]} {
    %c0 = arith.constant 0 : index
    %c0_0 = arith.constant 0 : index
    %0 = vector.load %arg1[%c0, %c0_0] : memref<32x37xf32, #tpu.memory_space<vmem>>, vector<32x37xf32>
    %1 = vector.extract_strided_slice %0 {offsets = [0, 0], sizes = [32, 16], strides = [1, 1]} : vector<32x37xf32> to vector<32x16xf32>
    %2 = vector.extract_strided_slice %0 {offsets = [0, 16], sizes = [32, 12], strides = [1, 1]} : vector<32x37xf32> to vector<32x12xf32>
    %3 = vector.extract_strided_slice %0 {offsets = [0, 28], sizes = [32, 9], strides = [1, 1]} : vector<32x37xf32> to vector<32x9xf32>
    %c0_1 = arith.constant 0 : index
    %c0_2 = arith.constant 0 : index
    %4 = vector.load %arg2[%c0_1, %c0_2] : memref<12x39xf32, #tpu.memory_space<vmem>>, vector<12x39xf32>
    %cst = arith.constant dense<0.000000e+00> : vector<32x39xf32>
    %5 = tpu.matmul %2, %4, %cst {dimension_numbers = #tpu.dot_dimension_numbers<[1], [0], [0], [1], [0, 0, 1, 1], [], []>} : vector<32x12xf32>, vector<12x39xf32>, vector<32x39xf32> -> vector<32x39xf32>
    %6 = vector.extract_strided_slice %5 {offsets = [0, 0], sizes = [32, 12], strides = [1, 1]} : vector<32x39xf32> to vector<32x12xf32>
    %7 = vector.extract_strided_slice %5 {offsets = [0, 12], sizes = [32, 27], strides = [1, 1]} : vector<32x39xf32> to vector<32x27xf32>
    %8 = arith.mulf %6, %6 : vector<32x12xf32>
    %c0_3 = arith.constant 0 : index
    %c0_4 = arith.constant 0 : index
    %9 = vector.load %arg3[%c0_3, %c0_4] : memref<12x4xf32, #tpu.memory_space<vmem>>, vector<12x4xf32>
    %cst_5 = arith.constant dense<0.000000e+00> : vector<32x4xf32>
    %10 = tpu.matmul %8, %9, %cst_5 {dimension_numbers = #tpu.dot_dimension_numbers<[1], [0], [0], [1], [0, 0, 1, 1], [], []>} : vector<32x12xf32>, vector<12x4xf32>, vector<32x4xf32> -> vector<32x4xf32>
    %c0_6 = arith.constant 0 : index
    %c0_7 = arith.constant 0 : index
    %11 = vector.load %arg6[%c0_6, %c0_7] : memref<12x12xf32, #tpu.memory_space<vmem>>, vector<12x12xf32>
    %cst_8 = arith.constant dense<0.000000e+00> : vector<32x12xf32>
    %12 = tpu.matmul %6, %11, %cst_8 {dimension_numbers = #tpu.dot_dimension_numbers<[1], [0], [0], [1], [0, 0, 1, 1], [], []>} : vector<32x12xf32>, vector<12x12xf32>, vector<32x12xf32> -> vector<32x12xf32>
    %cst_9 = arith.constant 9.99999993E-9 : f32
    %13 = vector.broadcast %cst_9 : f32 to vector<32x4xf32>
    %14 = arith.addf %10, %13 : vector<32x4xf32>
    %15 = math.sqrt %14 : vector<32x4xf32>
    %cst_10 = arith.constant 9.99999993E-9 : f32
    %16 = vector.broadcast %cst_10 : f32 to vector<32x4xf32>
    %17 = arith.addf %15, %16 : vector<32x4xf32>
    %18 = tpu.concatenate %3, %3, %3 in 1 : vector<32x9xf32>, vector<32x9xf32>, vector<32x9xf32> -> vector<32x27xf32>
    %19 = arith.mulf %18, %7 : vector<32x27xf32>
    %20 = tpu.concatenate %1, %17, %19 in 1 : vector<32x16xf32>, vector<32x4xf32>, vector<32x27xf32> -> vector<32x47xf32>
    %c0_11 = arith.constant 0 : index
    %c0_12 = arith.constant 0 : index
    %21 = vector.load %arg4[%c0_11, %c0_12] : memref<47x16xf32, #tpu.memory_space<vmem>>, vector<47x16xf32>
    %cst_13 = arith.constant dense<0.000000e+00> : vector<32x16xf32>
    %22 = tpu.matmul %20, %21, %cst_13 {dimension_numbers = #tpu.dot_dimension_numbers<[1], [0], [0], [1], [0, 0, 1, 1], [], []>} : vector<32x47xf32>, vector<47x16xf32>, vector<32x16xf32> -> vector<32x16xf32>
    %c0_14 = arith.constant 0 : index
    %c0_15 = arith.constant 0 : index
    %23 = vector.load %arg5[%c0_14, %c0_15] : memref<1x16xf32, #tpu.memory_space<vmem>>, vector<1x16xf32>
    %24 = vector.broadcast %23 : vector<1x16xf32> to vector<32x16xf32>
    %25 = arith.addf %22, %24 : vector<32x16xf32>
    %26 = arith.negf %25 : vector<32x16xf32>
    %27 = math.exp %26 : vector<32x16xf32>
    %cst_16 = arith.constant 1.000000e+00 : f32
    %28 = vector.broadcast %cst_16 : f32 to vector<32x16xf32>
    %29 = arith.addf %28, %27 : vector<32x16xf32>
    %30 = arith.divf %28, %29 : vector<32x16xf32>
    %31 = arith.mulf %25, %30 : vector<32x16xf32>
    %c0_17 = arith.constant 0 : index
    %c0_18 = arith.constant 0 : index
    %32 = vector.load %arg7[%c0_17, %c0_18] : memref<16x4xf32, #tpu.memory_space<vmem>>, vector<16x4xf32>
    %cst_19 = arith.constant dense<0.000000e+00> : vector<32x4xf32>
    %33 = tpu.matmul %31, %32, %cst_19 {dimension_numbers = #tpu.dot_dimension_numbers<[1], [0], [0], [1], [0, 0, 1, 1], [], []>} : vector<32x16xf32>, vector<16x4xf32>, vector<32x4xf32> -> vector<32x4xf32>
    %c0_20 = arith.constant 0 : index
    %c0_21 = arith.constant 0 : index
    %34 = vector.load %arg8[%c0_20, %c0_21] : memref<1x4xf32, #tpu.memory_space<vmem>>, vector<1x4xf32>
    %35 = vector.broadcast %34 : vector<1x4xf32> to vector<32x4xf32>
    %36 = arith.addf %33, %35 : vector<32x4xf32>
    %37 = arith.negf %36 : vector<32x4xf32>
    %38 = math.exp %37 : vector<32x4xf32>
    %cst_22 = arith.constant 1.000000e+00 : f32
    %39 = vector.broadcast %cst_22 : f32 to vector<32x4xf32>
    %40 = arith.addf %39, %38 : vector<32x4xf32>
    %41 = arith.divf %39, %40 : vector<32x4xf32>
    %42 = tpu.concatenate %41, %41, %41 in 1 : vector<32x4xf32>, vector<32x4xf32>, vector<32x4xf32> -> vector<32x12xf32>
    %43 = arith.mulf %12, %42 : vector<32x12xf32>
    %44 = tpu.concatenate %31, %43 in 1 : vector<32x16xf32>, vector<32x12xf32> -> vector<32x28xf32>
    %c0_23 = arith.constant 0 : index
    %c0_24 = arith.constant 0 : index
    %45 = vector.load %arg9[%c0_23, %c0_24] : memref<32x28xf32, #tpu.memory_space<vmem>>, vector<32x28xf32>
    tpu.vector_store %arg9[%c0_23, %c0_24], %44 {strides = array<i32>} : memref<32x28xf32, #tpu.memory_space<vmem>>, vector<32x28xf32>,
    return
  }
  func.func @transform_0(%arg0: i32) -> (i32, i32) {
    %c0_i32 = arith.constant 0 : i32
    %c0_i32_0 = arith.constant 0 : i32
    return %arg0, %c0_i32 : i32, i32
  }
  func.func @transform_1(%arg0: i32) -> (i32, i32) {
    %c0_i32 = arith.constant 0 : i32
    %c0_i32_0 = arith.constant 0 : i32
    %c0_i32_1 = arith.constant 0 : i32
    return %c0_i32, %c0_i32_0 : i32, i32
  }
  func.func @transform_2(%arg0: i32) -> (i32, i32) {
    %c0_i32 = arith.constant 0 : i32
    %c0_i32_0 = arith.constant 0 : i32
    %c0_i32_1 = arith.constant 0 : i32
    return %c0_i32, %c0_i32_0 : i32, i32
  }
  func.func @transform_3(%arg0: i32) -> (i32, i32) {
    %c0_i32 = arith.constant 0 : i32
    %c0_i32_0 = arith.constant 0 : i32
    %c0_i32_1 = arith.constant 0 : i32
    return %c0_i32, %c0_i32_0 : i32, i32
  }
  func.func @transform_4(%arg0: i32) -> (i32, i32) {
    %c0_i32 = arith.constant 0 : i32
    %c0_i32_0 = arith.constant 0 : i32
    %c0_i32_1 = arith.constant 0 : i32
    return %c0_i32, %c0_i32_0 : i32, i32
  }
  func.func @transform_5(%arg0: i32) -> (i32, i32) {
    %c0_i32 = arith.constant 0 : i32
    %c0_i32_0 = arith.constant 0 : i32
    %c0_i32_1 = arith.constant 0 : i32
    return %c0_i32, %c0_i32_0 : i32, i32
  }
  func.func @transform_6(%arg0: i32) -> (i32, i32) {
    %c0_i32 = arith.constant 0 : i32
    %c0_i32_0 = arith.constant 0 : i32
    %c0_i32_1 = arith.constant 0 : i32
    return %c0_i32, %c0_i32_0 : i32, i32
  }
  func.func @transform_7(%arg0: i32) -> (i32, i32) {
    %c0_i32 = arith.constant 0 : i32
    %c0_i32_0 = arith.constant 0 : i32
    %c0_i32_1 = arith.constant 0 : i32
    return %c0_i32, %c0_i32_0 : i32, i32
  }
  func.func @transform_8(%arg0: i32) -> (i32, i32) {
    %c0_i32 = arith.constant 0 : i32
    %c0_i32_0 = arith.constant 0 : i32
    return %arg0, %c0_i32 : i32, i32
  }
}

</mosaic_0001>

<llo_original>
// kernel: tpu_custom_call.1
$region0: #{tpu_custom_call.1}
  #allocation0 [shape = 'u32[]', space=smem, size = 0x4, offset = 0x4, fixed_abs, tag = 'smem constant byte address 0x4 - core index']
  #allocation1 [shape = 'u32[144,128]{1,0:T(1,128)}', space=vmem, size = 0x12000, scoped, tag = 'internal scratch']
  %s0 = inlined_call_operand.vmem [shape: f32[32,37], index: 0, kind: input, shape index: {}]
  %s1 = inlined_call_operand.vmem [shape: f32[12,39], index: 1, kind: input, shape index: {}]
  %s2 = inlined_call_operand.vmem [shape: f32[12,4], index: 2, kind: input, shape index: {}]
  %s3 = inlined_call_operand.vmem [shape: f32[47,16], index: 3, kind: input, shape index: {}]
  %s4 = inlined_call_operand.vmem [shape: f32[1,16], index: 4, kind: input, shape index: {}]
  %s5 = inlined_call_operand.vmem [shape: f32[12,12], index: 5, kind: input, shape index: {}]
  %s6 = inlined_call_operand.vmem [shape: f32[16,4], index: 6, kind: input, shape index: {}]
  %s7 = inlined_call_operand.vmem [shape: f32[1,4], index: 7, kind: input, shape index: {}]
  %s8 = inlined_call_operand.hbm [shape: f32[32,28], index: 8, kind: output, shape index: {}]
  %s9 = sld [smem:[#allocation0]]
  $region42: #{tpu_custom_call.1} parent=0
    _
  %s11 = ssub.s32 1, %s9
  %s12 = scalar_select 0, %s11, %s9
  $region1: #{tpu_custom_call.1} parent=0
    #allocation2 [shape = 'u8[16384]{0}', space=vmem, size = 0x4000, scoped, tag = 'output window, operand 0, single buffered']
    #allocation3 [shape = 's32[1]{0}', space=sflag, size = 0x4, scoped, tag = 'scoped memory for tpu_custom_call.1']
    %13 = vsyncpa [#allocation3], 0
    // Predicated region
    $region2: #{tpu_custom_call.1} parent=1 // pred_check
      _
    $region3: #{tpu_custom_call.1} parent=1 // pred_check_branch
      %15 = sbr.rel (0) target = $region5
    $region4: #{tpu_custom_call.1} parent=1 // pred_region
      _
    $region5: #{tpu_custom_call.1} parent=1 // pred_fallthru
      _
    // Predicated region
    $region6: #{tpu_custom_call.1} parent=1 // pred_check
      _
    $region7: #{tpu_custom_call.1} parent=1 // pred_check_branch
      %17 = sbr.rel (0) target = $region9
    $region8: #{tpu_custom_call.1} parent=1 // pred_region
      _
    $region9: #{tpu_custom_call.1} parent=1 // pred_fallthru
      _
    // Predicated region
    $region10: #{tpu_custom_call.1} parent=1 // pred_check
      _
    $region11: #{tpu_custom_call.1} parent=1 // pred_check_branch
      %19 = sbr.rel (0) target = $region13
    $region12: #{tpu_custom_call.1} parent=1 // pred_region
      _
    $region13: #{tpu_custom_call.1} parent=1 // pred_fallthru
      _
    // Predicated region
    $region14: #{tpu_custom_call.1} parent=1 // pred_check
      _
    $region15: #{tpu_custom_call.1} parent=1 // pred_check_branch
      %21 = sbr.rel (0) target = $region17
    $region16: #{tpu_custom_call.1} parent=1 // pred_region
      _
    $region17: #{tpu_custom_call.1} parent=1 // pred_fallthru
      _
    // Predicated region
    $region18: #{tpu_custom_call.1} parent=1 // pred_check
      _
    $region19: #{tpu_custom_call.1} parent=1 // pred_check_branch
      %23 = sbr.rel (0) target = $region21
    $region20: #{tpu_custom_call.1} parent=1 // pred_region
      _
    $region21: #{tpu_custom_call.1} parent=1 // pred_fallthru
      _
    // Predicated region
    $region22: #{tpu_custom_call.1} parent=1 // pred_check
      _
    $region23: #{tpu_custom_call.1} parent=1 // pred_check_branch
      %25 = sbr.rel (0) target = $region25
    $region24: #{tpu_custom_call.1} parent=1 // pred_region
      _
    $region25: #{tpu_custom_call.1} parent=1 // pred_fallthru
      _
    // Predicated region
    $region26: #{tpu_custom_call.1} parent=1 // pred_check
      _
    $region27: #{tpu_custom_call.1} parent=1 // pred_check_branch
      %27 = sbr.rel (0) target = $region29
    $region28: #{tpu_custom_call.1} parent=1 // pred_region
      _
    $region29: #{tpu_custom_call.1} parent=1 // pred_fallthru
      _
    // Predicated region
    $region30: #{tpu_custom_call.1} parent=1 // pred_check
      _
    $region31: #{tpu_custom_call.1} parent=1 // pred_check_branch
      %29 = sbr.rel (0) target = $region33
    $region32: #{tpu_custom_call.1} parent=1 // pred_region
      _
    $region33: #{tpu_custom_call.1} parent=1 // pred_fallthru
      _
    %v30 = vld [vmem:[%s0] sm:$0xff]
    %v31 = vld [vmem:[%s0 + $0x8] sm:$0xff]
    %v32 = vld [vmem:[%s0 + $0x10] sm:$0xff]
    %v33 = vld [vmem:[%s0 + $0x18] sm:$0xff]
    %v34 = vld [vmem:[%s1] sm:$0xff]
    %v35 = vld [vmem:[%s1 + $0x8] sm:$0xf]
    %40 = vrot.lane.b32.xlu0 %v30, 112
    %v41 = vpop.permute.xlu0 %40
    %42 = vrot.lane.b32.xlu0 %v31, 112
    %v43 = vpop.permute.xlu0 %42
    %44 = vrot.lane.b32.xlu0 %v32, 112
    %v45 = vpop.permute.xlu0 %44
    %46 = vrot.lane.b32.xlu0 %v33, 112
    %v47 = vpop.permute.xlu0 %46
    %vm48 = vcmask 97280
    %v49 = vsel %vm48, %v41, 0
    %v51 = vsel %vm48, %v43, 0
    %v53 = vsel %vm48, %v45, 0
    %v55 = vsel %vm48, %v47, 0
    %vm57 = vcmask 1043456
    %v59 = vsel %vm57, %v35, 0
    %61 = vmatprep.subr.mxu0 0.0
    %62 = vmatpush1.msra.mxu0 %v34
    %63 = vmatprep.subr.mxu0 0.0
    %64 = vmatpush1.msra.mxu0 %v59
    %65 = vmatprep.subr.mxu0 0.0
    %66 = vmatpush1.msra.mxu0 0.0
    %67 = vmatprep.subr.mxu0 0.0
    %68 = vmatpush1.msra.mxu0 0.0
    %69 = vmatprep.subr.mxu0 0.0
    %70 = vmatpush1.msra.mxu0 0.0
    %71 = vmatprep.subr.mxu0 0.0
    %72 = vmatpush1.msra.mxu0 0.0
    %73 = vmatprep.subr.mxu0 0.0
    %74 = vmatpush1.msra.mxu0 0.0
    %75 = vmatprep.subr.mxu0 0.0
    %76 = vmatpush1.msra.mxu0 0.0
    %77 = vmatprep.subr.mxu0 0.0
    %78 = vmatpush1.msra.mxu0 0.0
    %79 = vmatprep.subr.mxu0 0.0
    %80 = vmatpush1.msra.mxu0 0.0
    %81 = vmatprep.subr.mxu0 0.0
    %82 = vmatpush1.msra.mxu0 0.0
    %83 = vmatprep.subr.mxu0 0.0
    %84 = vmatpush1.msra.mxu0 0.0
    %85 = vmatprep.subr.mxu0 0.0
    %86 = vmatpush1.msra.mxu0 0.0
    %87 = vmatprep.subr.mxu0 0.0
    %88 = vmatpush1.msra.mxu0 0.0
    %89 = vmatprep.subr.mxu0 0.0
    %90 = vmatpush1.msra.mxu0 0.0
    %91 = vmatprep.subr.mxu0 0.0
    %92 = vmatpush1.msra.mxu0 0.0
    %93 = vmatprep.subr.mxu0 0.0
    %94 = vmatpush1.msra.mxu0 0.0
    %95 = vmatprep.subr.mxu0 0.0
    %96 = vmatpush1.msra.mxu0 0.0
    %97 = vmatprep.subr.mxu0 0.0
    %98 = vmatpush1.msra.mxu0 0.0
    %99 = vmatprep.subr.mxu0 0.0
    %100 = vmatpush1.msra.mxu0 0.0
    %101 = vmatprep.subr.mxu0 0.0
    %102 = vmatpush1.msra.mxu0 0.0
    %103 = vmatprep.subr.mxu0 0.0
    %104 = vmatpush1.msra.mxu0 0.0
    %105 = vmatprep.subr.mxu0 0.0
    %106 = vmatpush1.msra.mxu0 0.0
    %107 = vmatprep.subr.mxu0 0.0
    %108 = vmatpush1.msra.mxu0 0.0
    %109 = vmatprep.subr.mxu0 0.0
    %110 = vmatpush1.msra.mxu0 0.0
    %111 = vmatprep.subr.mxu0 0.0
    %112 = vmatpush1.msra.mxu0 0.0
    %113 = vmatprep.subr.mxu0 0.0
    %114 = vmatpush1.msra.mxu0 0.0
    %115 = vmatprep.subr.mxu0 0.0
    %116 = vmatpush1.msra.mxu0 0.0
    %117 = vmatprep.subr.mxu0 0.0
    %118 = vmatpush1.msra.mxu0 0.0
    %119 = vmatprep.subr.mxu0 0.0
    %120 = vmatpush1.msra.mxu0 0.0
    %121 = vmatprep.subr.mxu0 0.0
    %122 = vmatpush1.msra.mxu0 0.0
    %123 = vmatprep.subr.mxu0 0.0
    %124 = vmatpush1.msra.mxu0 0.0
    %125 = vmatprep.mubr.f32.mxu0 0.0
    %126 = vmatmul.mubr.f32.gmra.mrb[0].mxu0 %v49
    %v127 = vpop.f32.mrb[0].mxu0
    %v128 = vadd.f32 0.0, %v127
    %v129 = vpop.f32.mrb[0].mxu0
    %130 = vmatprep.mubr.f32.mxu0 0.0
    %131 = vmatmul.mubr.f32.gmra.mrb[0].mxu0 %v51
    %v132 = vpop.f32.mrb[0].mxu0
    %v133 = vadd.f32 0.0, %v132
    %v134 = vpop.f32.mrb[0].mxu0
    %135 = vmatprep.mubr.f32.mxu0 0.0
    %136 = vmatmul.mubr.f32.gmra.mrb[0].mxu0 %v53
    %v137 = vpop.f32.mrb[0].mxu0
    %v138 = vadd.f32 0.0, %v137
    %v139 = vpop.f32.mrb[0].mxu0
    %140 = vmatprep.mubr.f32.mxu0 0.0
    %141 = vmatmul.mubr.f32.gmra.mrb[0].mxu0 %v55
    %v142 = vpop.f32.mrb[0].mxu0
    %v143 = vadd.f32 0.0, %v142
    %v144 = vpop.f32.mrb[0].mxu0
    %145 = vdwg.mxu0
    %v146 = vmul.f32 %v128, %v128
    %v147 = vmul.f32 %v133, %v133
    %v148 = vmul.f32 %v138, %v138
    %v149 = vmul.f32 %v143, %v143
    %v150 = vld [vmem:[%s2] sm:$0xff]
    %v151 = vld [vmem:[%s2 + $0x8] sm:$0xf]
    %v152 = vld [vmem:[%s5] sm:$0xff]
    %v153 = vld [vmem:[%s5 + $0x8] sm:$0xf]
    %v155 = vsel %vm48, %v128, 0
    %v158 = vsel %vm48, %v133, 0
    %v161 = vsel %vm48, %v138, 0
    %v164 = vsel %vm48, %v143, 0
    %v167 = vsel %vm57, %v153, 0
    %169 = vmatprep.subr.mxu0 0.0
    %170 = vmatpush1.msra.mxu0 %v152
    %171 = vmatprep.subr.mxu0 0.0
    %172 = vmatpush1.msra.mxu0 %v167
    %173 = vmatprep.subr.mxu0 0.0
    %174 = vmatpush1.msra.mxu0 0.0
    %175 = vmatprep.subr.mxu0 0.0
    %176 = vmatpush1.msra.mxu0 0.0
    %177 = vmatprep.subr.mxu0 0.0
    %178 = vmatpush1.msra.mxu0 0.0
    %179 = vmatprep.subr.mxu0 0.0
    %180 = vmatpush1.msra.mxu0 0.0
    %181 = vmatprep.subr.mxu0 0.0
    %182 = vmatpush1.msra.mxu0 0.0
    %183 = vmatprep.subr.mxu0 0.0
    %184 = vmatpush1.msra.mxu0 0.0
    %185 = vmatprep.subr.mxu0 0.0
    %186 = vmatpush1.msra.mxu0 0.0
    %187 = vmatprep.subr.mxu0 0.0
    %188 = vmatpush1.msra.mxu0 0.0
    %189 = vmatprep.subr.mxu0 0.0
    %190 = vmatpush1.msra.mxu0 0.0
    %191 = vmatprep.subr.mxu0 0.0
    %192 = vmatpush1.msra.mxu0 0.0
    %193 = vmatprep.subr.mxu0 0.0
    %194 = vmatpush1.msra.mxu0 0.0
    %195 = vmatprep.subr.mxu0 0.0
    %196 = vmatpush1.msra.mxu0 0.0
    %197 = vmatprep.subr.mxu0 0.0
    %198 = vmatpush1.msra.mxu0 0.0
    %199 = vmatprep.subr.mxu0 0.0
    %200 = vmatpush1.msra.mxu0 0.0
    %201 = vmatprep.subr.mxu0 0.0
    %202 = vmatpush1.msra.mxu0 0.0
    %203 = vmatprep.subr.mxu0 0.0
    %204 = vmatpush1.msra.mxu0 0.0
    %205 = vmatprep.subr.mxu0 0.0
    %206 = vmatpush1.msra.mxu0 0.0
    %207 = vmatprep.subr.mxu0 0.0
    %208 = vmatpush1.msra.mxu0 0.0
    %209 = vmatprep.subr.mxu0 0.0
    %210 = vmatpush1.msra.mxu0 0.0
    %211 = vmatprep.subr.mxu0 0.0
    %212 = vmatpush1.msra.mxu0 0.0
    %213 = vmatprep.subr.mxu0 0.0
    %214 = vmatpush1.msra.mxu0 0.0
    %215 = vmatprep.subr.mxu0 0.0
    %216 = vmatpush1.msra.mxu0 0.0
    %217 = vmatprep.subr.mxu0 0.0
    %218 = vmatpush1.msra.mxu0 0.0
    %219 = vmatprep.subr.mxu0 0.0
    %220 = vmatpush1.msra.mxu0 0.0
    %221 = vmatprep.subr.mxu0 0.0
    %222 = vmatpush1.msra.mxu0 0.0
    %223 = vmatprep.subr.mxu0 0.0
    %224 = vmatpush1.msra.mxu0 0.0
    %225 = vmatprep.subr.mxu0 0.0
    %226 = vmatpush1.msra.mxu0 0.0
    %227 = vmatprep.subr.mxu0 0.0
    %228 = vmatpush1.msra.mxu0 0.0
    %229 = vmatprep.subr.mxu0 0.0
    %230 = vmatpush1.msra.mxu0 0.0
    %231 = vmatprep.subr.mxu0 0.0
    %232 = vmatpush1.msra.mxu0 0.0
    %233 = vmatprep.mubr.f32.mxu0 0.0
    %234 = vmatmul.mubr.f32.gmra.mrb[0].mxu0 %v155
    %v235 = vpop.f32.mrb[0].mxu0
    %v236 = vadd.f32 0.0, %v235
    %v237 = vpop.f32.mrb[0].mxu0
    %238 = vmatprep.mubr.f32.mxu0 0.0
    %239 = vmatmul.mubr.f32.gmra.mrb[0].mxu0 %v158
    %v240 = vpop.f32.mrb[0].mxu0
    %v241 = vadd.f32 0.0, %v240
    %v242 = vpop.f32.mrb[0].mxu0
    %243 = vmatprep.mubr.f32.mxu0 0.0
    %244 = vmatmul.mubr.f32.gmra.mrb[0].mxu0 %v161
    %v245 = vpop.f32.mrb[0].mxu0
    %v246 = vadd.f32 0.0, %v245
    %v247 = vpop.f32.mrb[0].mxu0
    %248 = vmatprep.mubr.f32.mxu0 0.0
    %249 = vmatmul.mubr.f32.gmra.mrb[0].mxu0 %v164
    %v250 = vpop.f32.mrb[0].mxu0
    %v251 = vadd.f32 0.0, %v250
    %v252 = vpop.f32.mrb[0].mxu0
    %253 = vdwg.mxu0
    %v255 = vsel %vm48, %v146, 0
    %v258 = vsel %vm48, %v147, 0
    %v261 = vsel %vm48, %v148, 0
    %v264 = vsel %vm48, %v149, 0
    %v267 = vsel %vm57, %v151, 0
    %269 = vmatprep.subr.mxu0 0.0
    %270 = vmatpush1.msra.mxu0 %v150
    %271 = vmatprep.subr.mxu0 0.0
    %272 = vmatpush1.msra.mxu0 %v267
    %273 = vmatprep.subr.mxu0 0.0
    %274 = vmatpush1.msra.mxu0 0.0
    %275 = vmatprep.subr.mxu0 0.0
    %276 = vmatpush1.msra.mxu0 0.0
    %277 = vmatprep.subr.mxu0 0.0
    %278 = vmatpush1.msra.mxu0 0.0
    %279 = vmatprep.subr.mxu0 0.0
    %280 = vmatpush1.msra.mxu0 0.0
    %281 = vmatprep.subr.mxu0 0.0
    %282 = vmatpush1.msra.mxu0 0.0
    %283 = vmatprep.subr.mxu0 0.0
    %284 = vmatpush1.msra.mxu0 0.0
    %285 = vmatprep.subr.mxu0 0.0
    %286 = vmatpush1.msra.mxu0 0.0
    %287 = vmatprep.subr.mxu0 0.0
    %288 = vmatpush1.msra.mxu0 0.0
    %289 = vmatprep.subr.mxu0 0.0
    %290 = vmatpush1.msra.mxu0 0.0
    %291 = vmatprep.subr.mxu0 0.0
    %292 = vmatpush1.msra.mxu0 0.0
    %293 = vmatprep.subr.mxu0 0.0
    %294 = vmatpush1.msra.mxu0 0.0
    %295 = vmatprep.subr.mxu0 0.0
    %296 = vmatpush1.msra.mxu0 0.0
    %297 = vmatprep.subr.mxu0 0.0
    %298 = vmatpush1.msra.mxu0 0.0
    %299 = vmatprep.subr.mxu0 0.0
    %300 = vmatpush1.msra.mxu0 0.0
    %301 = vmatprep.subr.mxu0 0.0
    %302 = vmatpush1.msra.mxu0 0.0
    %303 = vmatprep.subr.mxu0 0.0
    %304 = vmatpush1.msra.mxu0 0.0
    %305 = vmatprep.subr.mxu0 0.0
    %306 = vmatpush1.msra.mxu0 0.0
    %307 = vmatprep.subr.mxu0 0.0
    %308 = vmatpush1.msra.mxu0 0.0
    %309 = vmatprep.subr.mxu0 0.0
    %310 = vmatpush1.msra.mxu0 0.0
    %311 = vmatprep.subr.mxu0 0.0
    %312 = vmatpush1.msra.mxu0 0.0
    %313 = vmatprep.subr.mxu0 0.0
    %314 = vmatpush1.msra.mxu0 0.0
    %315 = vmatprep.subr.mxu0 0.0
    %316 = vmatpush1.msra.mxu0 0.0
    %317 = vmatprep.subr.mxu0 0.0
    %318 = vmatpush1.msra.mxu0 0.0
    %319 = vmatprep.subr.mxu0 0.0
    %320 = vmatpush1.msra.mxu0 0.0
    %321 = vmatprep.subr.mxu0 0.0
    %322 = vmatpush1.msra.mxu0 0.0
    %323 = vmatprep.subr.mxu0 0.0
    %324 = vmatpush1.msra.mxu0 0.0
    %325 = vmatprep.subr.mxu0 0.0
    %326 = vmatpush1.msra.mxu0 0.0
    %327 = vmatprep.subr.mxu0 0.0
    %328 = vmatpush1.msra.mxu0 0.0
    %329 = vmatprep.subr.mxu0 0.0
    %330 = vmatpush1.msra.mxu0 0.0
    %331 = vmatprep.subr.mxu0 0.0
    %332 = vmatpush1.msra.mxu0 0.0
    %333 = vmatprep.mubr.f32.mxu0 0.0
    %334 = vmatmul.mubr.f32.gmra.mrb[0].mxu0 %v255
    %v335 = vpop.f32.mrb[0].mxu0
    %v336 = vadd.f32 1e-08, %v335
    %v337 = vpop.f32.mrb[0].mxu0
    %338 = vmatprep.mubr.f32.mxu0 0.0
    %339 = vmatmul.mubr.f32.gmra.mrb[0].mxu0 %v258
    %v340 = vpop.f32.mrb[0].mxu0
    %v341 = vadd.f32 1e-08, %v340
    %v342 = vpop.f32.mrb[0].mxu0
    %343 = vmatprep.mubr.f32.mxu0 0.0
    %344 = vmatmul.mubr.f32.gmra.mrb[0].mxu0 %v261
    %v345 = vpop.f32.mrb[0].mxu0
    %v346 = vadd.f32 1e-08, %v345
    %v347 = vpop.f32.mrb[0].mxu0
    %348 = vmatprep.mubr.f32.mxu0 0.0
    %349 = vmatmul.mubr.f32.gmra.mrb[0].mxu0 %v264
    %v350 = vpop.f32.mrb[0].mxu0
    %v351 = vadd.f32 1e-08, %v350
    %v352 = vpop.f32.mrb[0].mxu0
    %353 = vdwg.mxu0
    %v354 = vrsqrt.pop %v336
    %v355 = vmul.f32 %v336, %v354
    %vm356 = vcmp.eq.f32.partialorder %v336, inf
    %v357 = vsel %vm356, %v336, %v355
    %vm358 = vcmp.eq.f32.partialorder %v336, 0.0
    %v359 = vand.u32 %v336, 2147483648
    %v360 = vsel %vm358, %v359, %v357
    %v361 = vrsqrt.pop %v341
    %v362 = vmul.f32 %v341, %v361
    %vm363 = vcmp.eq.f32.partialorder %v341, inf
    %v364 = vsel %vm363, %v341, %v362
    %vm365 = vcmp.eq.f32.partialorder %v341, 0.0
    %v366 = vand.u32 %v341, 2147483648
    %v367 = vsel %vm365, %v366, %v364
    %v368 = vrsqrt.pop %v346
    %v369 = vmul.f32 %v346, %v368
    %vm370 = vcmp.eq.f32.partialorder %v346, inf
    %v371 = vsel %vm370, %v346, %v369
    %vm372 = vcmp.eq.f32.partialorder %v346, 0.0
    %v373 = vand.u32 %v346, 2147483648
    %v374 = vsel %vm372, %v373, %v371
    %v375 = vrsqrt.pop %v351
    %v376 = vmul.f32 %v351, %v375
    %vm377 = vcmp.eq.f32.partialorder %v351, inf
    %v378 = vsel %vm377, %v351, %v376
    %vm379 = vcmp.eq.f32.partialorder %v351, 0.0
    %v380 = vand.u32 %v351, 2147483648
    %v381 = vsel %vm379, %v380, %v378
    %v382 = vadd.f32 %v360, 1e-08
    %v383 = vadd.f32 %v367, 1e-08
    %v384 = vadd.f32 %v374, 1e-08
    %v385 = vadd.f32 %v381, 1e-08
    %386 = vrot.lane.b32.xlu0 %v30, 100
    %v387 = vpop.permute.xlu0 %386
    %388 = vrot.lane.b32.xlu0 %v31, 100
    %v389 = vpop.permute.xlu0 %388
    %390 = vrot.lane.b32.xlu0 %v32, 100
    %v391 = vpop.permute.xlu0 %390
    %392 = vrot.lane.b32.xlu0 %v33, 100
    %v393 = vpop.permute.xlu0 %392
    %398 = vrot.lane.b32.xlu0 %v30, 109
    %v399 = vpop.permute.xlu0 %398
    %400 = vrot.lane.b32.xlu0 %v31, 109
    %v401 = vpop.permute.xlu0 %400
    %402 = vrot.lane.b32.xlu0 %v32, 109
    %v403 = vpop.permute.xlu0 %402
    %404 = vrot.lane.b32.xlu0 %v33, 109
    %v405 = vpop.permute.xlu0 %404
    %410 = vrot.lane.b32.xlu0 %v30, 118
    %v411 = vpop.permute.xlu0 %410
    %412 = vrot.lane.b32.xlu0 %v31, 118
    %v413 = vpop.permute.xlu0 %412
    %414 = vrot.lane.b32.xlu0 %v32, 118
    %v415 = vpop.permute.xlu0 %414
    %416 = vrot.lane.b32.xlu0 %v33, 118
    %v417 = vpop.permute.xlu0 %416
    %vm422 = vcmask 72704
    %v423 = vsel %vm422, %v387, %v399
    %v424 = vsel %vm422, %v389, %v401
    %v425 = vsel %vm422, %v391, %v403
    %v426 = vsel %vm422, %v393, %v405
    %vm427 = vcmask 146432
    %v428 = vsel %vm427, %v423, %v411
    %v429 = vsel %vm427, %v424, %v413
    %v430 = vsel %vm427, %v425, %v415
    %v431 = vsel %vm427, %v426, %v417
    %432 = vrot.lane.b32.xlu0 %v128, 116
    %v433 = vpop.permute.xlu0 %432
    %434 = vrot.lane.b32.xlu0 %v133, 116
    %v435 = vpop.permute.xlu0 %434
    %436 = vrot.lane.b32.xlu0 %v138, 116
    %v437 = vpop.permute.xlu0 %436
    %438 = vrot.lane.b32.xlu0 %v143, 116
    %v439 = vpop.permute.xlu0 %438
    %v444 = vmul.f32 %v428, %v433
    %v445 = vmul.f32 %v429, %v435
    %v446 = vmul.f32 %v430, %v437
    %v447 = vmul.f32 %v431, %v439
    %452 = vrot.lane.b32.xlu0 %v382, 16
    %v453 = vpop.permute.xlu0 %452
    %454 = vrot.lane.b32.xlu0 %v383, 16
    %v455 = vpop.permute.xlu0 %454
    %456 = vrot.lane.b32.xlu0 %v384, 16
    %v457 = vpop.permute.xlu0 %456
    %458 = vrot.lane.b32.xlu0 %v385, 16
    %v459 = vpop.permute.xlu0 %458
    %468 = vrot.lane.b32.xlu0 %v444, 20
    %v469 = vpop.permute.xlu0 %468
    %470 = vrot.lane.b32.xlu0 %v445, 20
    %v471 = vpop.permute.xlu0 %470
    %472 = vrot.lane.b32.xlu0 %v446, 20
    %v473 = vpop.permute.xlu0 %472
    %474 = vrot.lane.b32.xlu0 %v447, 20
    %v475 = vpop.permute.xlu0 %474
    %vm480 = vcmask 130048
    %v481 = vsel %vm480, %v30, %v453
    %v482 = vsel %vm480, %v31, %v455
    %v483 = vsel %vm480, %v32, %v457
    %v484 = vsel %vm480, %v33, %v459
    %vm485 = vcmask 162816
    %v486 = vsel %vm485, %v481, %v469
    %v487 = vsel %vm485, %v482, %v471
    %v488 = vsel %vm485, %v483, %v473
    %v489 = vsel %vm485, %v484, %v475
    %v490 = vld [vmem:[%s3] sm:$0xff]
    %v491 = vld [vmem:[%s3 + $0x8] sm:$0xff]
    %v492 = vld [vmem:[%s3 + $0x10] sm:$0xff]
    %v493 = vld [vmem:[%s3 + $0x18] sm:$0xff]
    %v494 = vld [vmem:[%s3 + $0x20] sm:$0xff]
    %v495 = vld [vmem:[%s3 + $0x28] sm:$0x7f]
    %v496 = vld [vmem:[%s4] sm:$0x1]
    %v498 = vlaneseq
    %v499 = vshrl.u32 %v498, 7
    %v500 = vsub.s32 0, %v499
    %v501 = vrot.slane %v496, %v500
    %vm503 = vcmask 384000
    %v505 = vsel %vm503, %v486, 0
    %v508 = vsel %vm503, %v487, 0
    %v511 = vsel %vm503, %v488, 0
    %v514 = vsel %vm503, %v489, 0
    %vm516 = vcmask 1046528
    %v518 = vsel %vm516, %v495, 0
    %520 = vmatprep.subr.mxu0 0.0
    %521 = vmatpush1.msra.mxu0 %v490
    %522 = vmatprep.subr.mxu0 0.0
    %523 = vmatpush1.msra.mxu0 %v491
    %524 = vmatprep.subr.mxu0 0.0
    %525 = vmatpush1.msra.mxu0 %v492
    %526 = vmatprep.subr.mxu0 0.0
    %527 = vmatpush1.msra.mxu0 %v493
    %528 = vmatprep.subr.mxu0 0.0
    %529 = vmatpush1.msra.mxu0 %v494
    %530 = vmatprep.subr.mxu0 0.0
    %531 = vmatpush1.msra.mxu0 %v518
    %532 = vmatprep.subr.mxu0 0.0
    %533 = vmatpush1.msra.mxu0 0.0
    %534 = vmatprep.subr.mxu0 0.0
    %535 = vmatpush1.msra.mxu0 0.0
    %536 = vmatprep.subr.mxu0 0.0
    %537 = vmatpush1.msra.mxu0 0.0
    %538 = vmatprep.subr.mxu0 0.0
    %539 = vmatpush1.msra.mxu0 0.0
    %540 = vmatprep.subr.mxu0 0.0
    %541 = vmatpush1.msra.mxu0 0.0
    %542 = vmatprep.subr.mxu0 0.0
    %543 = vmatpush1.msra.mxu0 0.0
    %544 = vmatprep.subr.mxu0 0.0
    %545 = vmatpush1.msra.mxu0 0.0
    %546 = vmatprep.subr.mxu0 0.0
    %547 = vmatpush1.msra.mxu0 0.0
    %548 = vmatprep.subr.mxu0 0.0
    %549 = vmatpush1.msra.mxu0 0.0
    %550 = vmatprep.subr.mxu0 0.0
    %551 = vmatpush1.msra.mxu0 0.0
    %552 = vmatprep.subr.mxu0 0.0
    %553 = vmatpush1.msra.mxu0 0.0
    %554 = vmatprep.subr.mxu0 0.0
    %555 = vmatpush1.msra.mxu0 0.0
    %556 = vmatprep.subr.mxu0 0.0
    %557 = vmatpush1.msra.mxu0 0.0
    %558 = vmatprep.subr.mxu0 0.0
    %559 = vmatpush1.msra.mxu0 0.0
    %560 = vmatprep.subr.mxu0 0.0
    %561 = vmatpush1.msra.mxu0 0.0
    %562 = vmatprep.subr.mxu0 0.0
    %563 = vmatpush1.msra.mxu0 0.0
    %564 = vmatprep.subr.mxu0 0.0
    %565 = vmatpush1.msra.mxu0 0.0
    %566 = vmatprep.subr.mxu0 0.0
    %567 = vmatpush1.msra.mxu0 0.0
    %568 = vmatprep.subr.mxu0 0.0
    %569 = vmatpush1.msra.mxu0 0.0
    %570 = vmatprep.subr.mxu0 0.0
    %571 = vmatpush1.msra.mxu0 0.0
    %572 = vmatprep.subr.mxu0 0.0
    %573 = vmatpush1.msra.mxu0 0.0
    %574 = vmatprep.subr.mxu0 0.0
    %575 = vmatpush1.msra.mxu0 0.0
    %576 = vmatprep.subr.mxu0 0.0
    %577 = vmatpush1.msra.mxu0 0.0
    %578 = vmatprep.subr.mxu0 0.0
    %579 = vmatpush1.msra.mxu0 0.0
    %580 = vmatprep.subr.mxu0 0.0
    %581 = vmatpush1.msra.mxu0 0.0
    %582 = vmatprep.subr.mxu0 0.0
    %583 = vmatpush1.msra.mxu0 0.0
    %584 = vmatprep.mubr.f32.mxu0 0.0
    %585 = vmatmul.mubr.f32.gmra.mrb[0].mxu0 %v505
    %v586 = vpop.f32.mrb[0].mxu0
    %v587 = vadd.f32 %v501, %v586
    %v588 = vpop.f32.mrb[0].mxu0
    %589 = vmatprep.mubr.f32.mxu0 0.0
    %590 = vmatmul.mubr.f32.gmra.mrb[0].mxu0 %v508
    %v591 = vpop.f32.mrb[0].mxu0
    %v592 = vadd.f32 %v501, %v591
    %v593 = vpop.f32.mrb[0].mxu0
    %594 = vmatprep.mubr.f32.mxu0 0.0
    %595 = vmatmul.mubr.f32.gmra.mrb[0].mxu0 %v511
    %v596 = vpop.f32.mrb[0].mxu0
    %v597 = vadd.f32 %v501, %v596
    %v598 = vpop.f32.mrb[0].mxu0
    %599 = vmatprep.mubr.f32.mxu0 0.0
    %600 = vmatmul.mubr.f32.gmra.mrb[0].mxu0 %v514
    %v601 = vpop.f32.mrb[0].mxu0
    %v602 = vadd.f32 %v501, %v601
    %v603 = vpop.f32.mrb[0].mxu0
    %604 = vdwg.mxu0
    %v605 = vxor.u32 %v587, 2147483648
    %v606 = vxor.u32 %v592, 2147483648
    %v607 = vxor.u32 %v597, 2147483648
    %v608 = vxor.u32 %v602, 2147483648
    %v609 = vmul.f32 %v605, 1.442695
    %v610 = vpow.pop %v609
    %v611 = vmul.f32 %v606, 1.442695
    %v612 = vpow.pop %v611
    %v613 = vmul.f32 %v607, 1.442695
    %v614 = vpow.pop %v613
    %v615 = vmul.f32 %v608, 1.442695
    %v616 = vpow.pop %v615
    %v617 = vadd.f32 %v610, 1.0
    %v618 = vadd.f32 %v612, 1.0
    %v619 = vadd.f32 %v614, 1.0
    %v620 = vadd.f32 %v616, 1.0
    %v621 = vrcp.pop %v617
    %v622 = vmul.f32 1.0, %v621
    %v623 = vrcp.pop %v618
    %v624 = vmul.f32 1.0, %v623
    %v625 = vrcp.pop %v619
    %v626 = vmul.f32 1.0, %v625
    %v627 = vrcp.pop %v620
    %v628 = vmul.f32 1.0, %v627
    %v629 = vmul.f32 %v587, %v622
    %v630 = vmul.f32 %v592, %v624
    %v631 = vmul.f32 %v597, %v626
    %v632 = vmul.f32 %v602, %v628
    %v633 = vld [vmem:[%s6] sm:$0xff]
    %v634 = vld [vmem:[%s6 + $0x8] sm:$0xff]
    %v635 = vld [vmem:[%s7] sm:$0x1]
    %v637 = vlaneseq
    %v638 = vshrl.u32 %v637, 7
    %v639 = vsub.s32 0, %v638
    %v640 = vrot.slane %v635, %v639
    %v643 = vsel %vm480, %v629, 0
    %v646 = vsel %vm480, %v630, 0
    %v649 = vsel %vm480, %v631, 0
    %v652 = vsel %vm480, %v632, 0
    %654 = vmatprep.subr.mxu0 0.0
    %655 = vmatpush1.msra.mxu0 %v633
    %656 = vmatprep.subr.mxu0 0.0
    %657 = vmatpush1.msra.mxu0 %v634
    %658 = vmatprep.subr.mxu0 0.0
    %659 = vmatpush1.msra.mxu0 0.0
    %660 = vmatprep.subr.mxu0 0.0
    %661 = vmatpush1.msra.mxu0 0.0
    %662 = vmatprep.subr.mxu0 0.0
    %663 = vmatpush1.msra.mxu0 0.0
    %664 = vmatprep.subr.mxu0 0.0
    %665 = vmatpush1.msra.mxu0 0.0
    %666 = vmatprep.subr.mxu0 0.0
    %667 = vmatpush1.msra.mxu0 0.0
    %668 = vmatprep.subr.mxu0 0.0
    %669 = vmatpush1.msra.mxu0 0.0
    %670 = vmatprep.subr.mxu0 0.0
    %671 = vmatpush1.msra.mxu0 0.0
    %672 = vmatprep.subr.mxu0 0.0
    %673 = vmatpush1.msra.mxu0 0.0
    %674 = vmatprep.subr.mxu0 0.0
    %675 = vmatpush1.msra.mxu0 0.0
    %676 = vmatprep.subr.mxu0 0.0
    %677 = vmatpush1.msra.mxu0 0.0
    %678 = vmatprep.subr.mxu0 0.0
    %679 = vmatpush1.msra.mxu0 0.0
    %680 = vmatprep.subr.mxu0 0.0
    %681 = vmatpush1.msra.mxu0 0.0
    %682 = vmatprep.subr.mxu0 0.0
    %683 = vmatpush1.msra.mxu0 0.0
    %684 = vmatprep.subr.mxu0 0.0
    %685 = vmatpush1.msra.mxu0 0.0
    %686 = vmatprep.subr.mxu0 0.0
    %687 = vmatpush1.msra.mxu0 0.0
    %688 = vmatprep.subr.mxu0 0.0
    %689 = vmatpush1.msra.mxu0 0.0
    %690 = vmatprep.subr.mxu0 0.0
    %691 = vmatpush1.msra.mxu0 0.0
    %692 = vmatprep.subr.mxu0 0.0
    %693 = vmatpush1.msra.mxu0 0.0
    %694 = vmatprep.subr.mxu0 0.0
    %695 = vmatpush1.msra.mxu0 0.0
    %696 = vmatprep.subr.mxu0 0.0
    %697 = vmatpush1.msra.mxu0 0.0
    %698 = vmatprep.subr.mxu0 0.0
    %699 = vmatpush1.msra.mxu0 0.0
    %700 = vmatprep.subr.mxu0 0.0
    %701 = vmatpush1.msra.mxu0 0.0
    %702 = vmatprep.subr.mxu0 0.0
    %703 = vmatpush1.msra.mxu0 0.0
    %704 = vmatprep.subr.mxu0 0.0
    %705 = vmatpush1.msra.mxu0 0.0
    %706 = vmatprep.subr.mxu0 0.0
    %707 = vmatpush1.msra.mxu0 0.0
    %708 = vmatprep.subr.mxu0 0.0
    %709 = vmatpush1.msra.mxu0 0.0
    %710 = vmatprep.subr.mxu0 0.0
    %711 = vmatpush1.msra.mxu0 0.0
    %712 = vmatprep.subr.mxu0 0.0
    %713 = vmatpush1.msra.mxu0 0.0
    %714 = vmatprep.subr.mxu0 0.0
    %715 = vmatpush1.msra.mxu0 0.0
    %716 = vmatprep.subr.mxu0 0.0
    %717 = vmatpush1.msra.mxu0 0.0
    %718 = vmatprep.mubr.f32.mxu0 0.0
    %719 = vmatmul.mubr.f32.gmra.mrb[0].mxu0 %v643
    %v720 = vpop.f32.mrb[0].mxu0
    %v721 = vadd.f32 %v640, %v720
    %v722 = vpop.f32.mrb[0].mxu0
    %723 = vmatprep.mubr.f32.mxu0 0.0
    %724 = vmatmul.mubr.f32.gmra.mrb[0].mxu0 %v646
    %v725 = vpop.f32.mrb[0].mxu0
    %v726 = vadd.f32 %v640, %v725
    %v727 = vpop.f32.mrb[0].mxu0
    %728 = vmatprep.mubr.f32.mxu0 0.0
    %729 = vmatmul.mubr.f32.gmra.mrb[0].mxu0 %v649
    %v730 = vpop.f32.mrb[0].mxu0
    %v731 = vadd.f32 %v640, %v730
    %v732 = vpop.f32.mrb[0].mxu0
    %733 = vmatprep.mubr.f32.mxu0 0.0
    %734 = vmatmul.mubr.f32.gmra.mrb[0].mxu0 %v652
    %v735 = vpop.f32.mrb[0].mxu0
    %v736 = vadd.f32 %v640, %v735
    %v737 = vpop.f32.mrb[0].mxu0
    %738 = vdwg.mxu0
    %v739 = vxor.u32 %v721, 2147483648
    %v740 = vxor.u32 %v726, 2147483648
    %v741 = vxor.u32 %v731, 2147483648
    %v742 = vxor.u32 %v736, 2147483648
    %v743 = vmul.f32 %v739, 1.442695
    %v744 = vpow.pop %v743
    %v745 = vmul.f32 %v740, 1.442695
    %v746 = vpow.pop %v745
    %v747 = vmul.f32 %v741, 1.442695
    %v748 = vpow.pop %v747
    %v749 = vmul.f32 %v742, 1.442695
    %v750 = vpow.pop %v749
    %v751 = vadd.f32 %v744, 1.0
    %v752 = vadd.f32 %v746, 1.0
    %v753 = vadd.f32 %v748, 1.0
    %v754 = vadd.f32 %v750, 1.0
    %v755 = vrcp.pop %v751
    %v756 = vmul.f32 1.0, %v755
    %v757 = vrcp.pop %v752
    %v758 = vmul.f32 1.0, %v757
    %v759 = vrcp.pop %v753
    %v760 = vmul.f32 1.0, %v759
    %v761 = vrcp.pop %v754
    %v762 = vmul.f32 1.0, %v761
    %767 = vrot.lane.b32.xlu0 %v756, 4
    %v768 = vpop.permute.xlu0 %767
    %769 = vrot.lane.b32.xlu0 %v758, 4
    %v770 = vpop.permute.xlu0 %769
    %771 = vrot.lane.b32.xlu0 %v760, 4
    %v772 = vpop.permute.xlu0 %771
    %773 = vrot.lane.b32.xlu0 %v762, 4
    %v774 = vpop.permute.xlu0 %773
    %779 = vrot.lane.b32.xlu0 %v756, 8
    %v780 = vpop.permute.xlu0 %779
    %781 = vrot.lane.b32.xlu0 %v758, 8
    %v782 = vpop.permute.xlu0 %781
    %783 = vrot.lane.b32.xlu0 %v760, 8
    %v784 = vpop.permute.xlu0 %783
    %785 = vrot.lane.b32.xlu0 %v762, 8
    %v786 = vpop.permute.xlu0 %785
    %vm791 = vcmask 31744
    %v792 = vsel %vm791, %v756, %v768
    %v793 = vsel %vm791, %v758, %v770
    %v794 = vsel %vm791, %v760, %v772
    %v795 = vsel %vm791, %v762, %v774
    %vm796 = vcmask 64512
    %v797 = vsel %vm796, %v792, %v780
    %v798 = vsel %vm796, %v793, %v782
    %v799 = vsel %vm796, %v794, %v784
    %v800 = vsel %vm796, %v795, %v786
    %v801 = vmul.f32 %v236, %v797
    %v802 = vmul.f32 %v241, %v798
    %v803 = vmul.f32 %v246, %v799
    %v804 = vmul.f32 %v251, %v800
    %809 = vrot.lane.b32.xlu0 %v801, 16
    %v810 = vpop.permute.xlu0 %809
    %811 = vrot.lane.b32.xlu0 %v802, 16
    %v812 = vpop.permute.xlu0 %811
    %813 = vrot.lane.b32.xlu0 %v803, 16
    %v814 = vpop.permute.xlu0 %813
    %815 = vrot.lane.b32.xlu0 %v804, 16
    %v816 = vpop.permute.xlu0 %815
    %v821 = vsel %vm480, %v629, %v810
    %v822 = vsel %vm480, %v630, %v812
    %v823 = vsel %vm480, %v631, %v814
    %v824 = vsel %vm480, %v632, %v816
    %vm825 = vcmask 228352
    %826 = vst.msk [vmem:[#allocation2] sm:$0xff] %vm825, %v821
    %827 = vst.msk [vmem:[#allocation2 + $0x8] sm:$0xff] %vm825, %v822
    %828 = vst.msk [vmem:[#allocation2 + $0x10] sm:$0xff] %vm825, %v823
    %829 = vst.msk [vmem:[#allocation2 + $0x18] sm:$0xff] %vm825, %v824
    // Predicated region
    $region34: #{tpu_custom_call.1} parent=1 // pred_check
      _
    $region35: #{tpu_custom_call.1} parent=1 // pred_check_branch
      %831 = sbr.rel (0) target = $region37
    $region36: #{tpu_custom_call.1} parent=1 // pred_region
      %s833 = ssub.s32 512, 512
      %834 = vsyncadd [#allocation3], %s833
      %s835 = sshll.u32 [#allocation2], 4
      %s836 = int_to_ptr.vmem [resolvable:$true] %s835
      %841 = dma.vmem_to_hbm [thread:$0]  %s836, 512, %s8, [#allocation3], 128, 128, 8
    $region37: #{tpu_custom_call.1} parent=1 // pred_fallthru
      _
    // Predicated region
    $region38: #{tpu_custom_call.1} parent=1 // pred_check
      _
    $region39: #{tpu_custom_call.1} parent=1 // pred_check_branch
      %843 = sbr.rel (0) target = $region41
    $region40: #{tpu_custom_call.1} parent=1 // pred_region
      %844 = dma.done [#allocation3], 512
    $region41: #{tpu_custom_call.1} parent=1 // pred_fallthru
      _
    %845 = vsyncpa [#allocation3], 1

</llo_original>
